<compile_context>
chip_gen: v7x
topology: tpu7x:2x2x1
jax: 0.10.0
libtpu: 0.0.40
codegen_flags: <defaults>
</compile_context>

<pallas_src>
import math
import functools

import jax
import jax.numpy as jnp
from jax.experimental import pallas as pl
from jax.experimental.pallas import tpu as pltpu


# --------------------------------------------------------------------------- #
# helpers
# --------------------------------------------------------------------------- #

_MASK_VALUE = -0.7 * float(jnp.finfo(jnp.float32).max)   # large finite negative

# Tile targets (clamped / padded to the actual dims below; v7x-safe).
_TM, _TN, _TK = 512, 512, 2048        # projection matmul tiles
_TQ, _TKV = 256, 512                  # flash attention q / kv tiles
_TS_ROPE = 512                        # RoPE seq tile


def _default_vmem_limit():
    try:
        # ~75% of physical VMEM (96 MiB on v5e/v6e, 48 MiB on v7x).
        return int(pltpu.get_tpu_info().vmem_capacity_bytes * 3 // 4)
    except Exception:
        return 64 * 1024 * 1024


_VMEM_LIMIT = _default_vmem_limit()


def _round_up(x, m):
    return (x + m - 1) // m * m


def _fit_tile(dim, target):
    """For weight-controlled dims (N, K): largest tile <= target dividing dim."""
    t = min(dim, target)
    if dim % t:
        return dim          # Llama configs keep these dims nicely divisible
    return t


def rotary_cos_sin_half(position_ids, dim, base):
    """cos/sin of the *half* frequencies (the two halves of emb are identical)."""
    inv_freq = 1.0 / (base ** (jnp.arange(0, dim, 2, dtype=jnp.float32) / dim))
    freqs = position_ids.astype(jnp.float32)[..., None] * inv_freq[None, None, :]
    return jnp.cos(freqs), jnp.sin(freqs)        # [B, S, dim//2] each


# --------------------------------------------------------------------------- #
# tiled matmul kernel (projections)
# --------------------------------------------------------------------------- #

def _matmul_kernel(x_ref, w_ref, o_ref, acc_ref):
    @pl.when(pl.program_id(2) == 0)
    def _init():
        acc_ref[...] = jnp.zeros_like(acc_ref)

    acc_ref[...] += jnp.dot(x_ref[...], w_ref[...],
                            preferred_element_type=jnp.float32)

    @pl.when(pl.program_id(2) == pl.num_programs(2) - 1)
    def _store():
        o_ref[...] = acc_ref[...].astype(o_ref.dtype)


def pallas_matmul(x, w, out_dtype,
                  tm_target=_TM, tn_target=_TN, tk_target=_TK):
    """x: [M, K], w: [K, N] (already [in, out]) -> [M, N] in out_dtype."""
    M, K = x.shape
    K2, N = w.shape
    assert K == K2
    tn = _fit_tile(N, tn_target)
    tk = _fit_tile(K, tk_target)
    tm = min(tm_target, _round_up(M, 8))
    Mp = _round_up(M, tm)
    if Mp != M:                                    # pad+mask, never full-dim tile
        x = jnp.pad(x, ((0, Mp - M), (0, 0)))
    grid = (Mp // tm, N // tn, K // tk)
    bytes_acc = (Mp * K * x.dtype.itemsize + K * N * w.dtype.itemsize
                 + Mp * N * jnp.dtype(out_dtype).itemsize)
    out = pl.pallas_call(
        _matmul_kernel,
        grid=grid,
        in_specs=[
            pl.BlockSpec((tm, tk), lambda i, j, k: (i, k)),
            pl.BlockSpec((tk, tn), lambda i, j, k: (k, j)),
        ],
        out_specs=pl.BlockSpec((tm, tn), lambda i, j, k: (i, j)),
        out_shape=jax.ShapeDtypeStruct((Mp, N), out_dtype),
        scratch_shapes=[pltpu.VMEM((tm, tn), jnp.float32)],
        compiler_params=pltpu.CompilerParams(
            dimension_semantics=("parallel", "parallel", "arbitrary"),
            vmem_limit_bytes=_VMEM_LIMIT),
        cost_estimate=pl.CostEstimate(
            flops=2 * Mp * N * K, transcendentals=0, bytes_accessed=bytes_acc),
    )(x, w)
    if Mp != M:
        out = out[:M]
    return out


# --------------------------------------------------------------------------- #
# RoPE + head split + q pre-scale + v pass-through (single kernel)
# --------------------------------------------------------------------------- #

def _rope_split_kernel(qkv_ref, cos_ref, sin_ref, q_ref, k_ref, v_ref, *,
                       n_q_heads, n_kv_heads, head_dim, q_scale):
    D = head_dim
    h2 = D // 2
    c = cos_ref[...]          # (ts, D//2) f32
    s = sin_ref[...]

    def rope_write(x, out_ref, col):
        # x: (ts, D) f32; rotate-half written per half (no concat / roll needed)
        x1 = x[:, :h2]
        x2 = x[:, h2:]
        out_ref[:, col:col + h2] = (x1 * c - x2 * s).astype(out_ref.dtype)
        out_ref[:, col + h2:col + D] = (x2 * c + x1 * s).astype(out_ref.dtype)

    # q heads: RoPE + fold in the 1/sqrt(D) softmax scale once (not per kv step)
    for h in range(n_q_heads):
        x = qkv_ref[:, h * D:(h + 1) * D].astype(jnp.float32) * q_scale
        rope_write(x, q_ref, h * D)

    # k heads: RoPE only
    koff = n_q_heads * D
    for h in range(n_kv_heads):
        x = qkv_ref[:, koff + h * D:koff + (h + 1) * D].astype(jnp.float32)
        rope_write(x, k_ref, h * D)

    # v heads: pass-through (avoids an XLA slice copy of the fused QKV output)
    voff = (n_q_heads + n_kv_heads) * D
    v_ref[...] = qkv_ref[:, voff:].astype(v_ref.dtype)


def pallas_rope_split(qkv, cos_half, sin_half, n_q_heads, n_kv_heads, head_dim,
                      q_scale, out_dtype, ts_target=_TS_ROPE):
    """qkv: [B, S, (Hq+2*Hkv)*D] -> (q_rot [B,S,Hq*D], k_rot [B,S,Hkv*D], v)."""
    B, S, Ntot = qkv.shape
    D = head_dim
    ts = S if S <= ts_target else ts_target
    grid = (B, pl.cdiv(S, ts))
    nq, nkv = n_q_heads * D, n_kv_heads * D
    kernel = functools.partial(_rope_split_kernel, n_q_heads=n_q_heads,
                               n_kv_heads=n_kv_heads, head_dim=D,
                               q_scale=q_scale)
    return pl.pallas_call(
        kernel,
        grid=grid,
        in_specs=[
            pl.BlockSpec((None, ts, Ntot), lambda b, si: (b, si, 0)),
            pl.BlockSpec((None, ts, D // 2), lambda b, si: (b, si, 0)),
            pl.BlockSpec((None, ts, D // 2), lambda b, si: (b, si, 0)),
        ],
        out_specs=[
            pl.BlockSpec((None, ts, nq), lambda b, si: (b, si, 0)),
            pl.BlockSpec((None, ts, nkv), lambda b, si: (b, si, 0)),
            pl.BlockSpec((None, ts, nkv), lambda b, si: (b, si, 0)),
        ],
        out_shape=(jax.ShapeDtypeStruct((B, S, nq), out_dtype),
                   jax.ShapeDtypeStruct((B, S, nkv), out_dtype),
                   jax.ShapeDtypeStruct((B, S, nkv), out_dtype)),
        compiler_params=pltpu.CompilerParams(
            dimension_semantics=("parallel", "parallel"),
            vmem_limit_bytes=_VMEM_LIMIT),
    )(qkv, cos_half, sin_half)


# --------------------------------------------------------------------------- #
# flash attention (causal, GQA, all heads per block, [B, S, H*D] layout)
# --------------------------------------------------------------------------- #

def _flash_attn_kernel(q_ref, k_ref, v_ref, o_ref, m_sc, l_sc, acc_sc, *,
                       n_q_heads, n_rep, head_dim, approx_recip):
    D = head_dim
    tq = q_ref.shape[0]
    tk = k_ref.shape[0]
    qi = pl.program_id(1)
    ki = pl.program_id(2)
    q_start = qi * tq
    k_start = ki * tk

    @pl.when(ki == 0)
    def _init():
        m_sc[...] = jnp.full_like(m_sc, _MASK_VALUE)
        l_sc[...] = jnp.zeros_like(l_sc)
        acc_sc[...] = jnp.zeros_like(acc_sc)

    def scores(h):
        kvh = h // n_rep
        q_h = q_ref[:, h * D:(h + 1) * D]          # (tq, D), q pre-scaled
        k_h = k_ref[:, kvh * D:(kvh + 1) * D]      # (tk, D)
        return jax.lax.dot_general(q_h, k_h, (((1,), (1,)), ((), ())),
                                   preferred_element_type=jnp.float32)

    def online_update(h, s):
        kvh = h // n_rep
        m_prev = m_sc[h]                           # (tq, 1)
        m_new = jnp.maximum(m_prev, jnp.max(s, axis=-1, keepdims=True))
        alpha = jnp.exp(m_prev - m_new)
        p = jnp.exp(s - m_new)
        l_sc[h] = alpha * l_sc[h] + jnp.sum(p, axis=-1, keepdims=True)
        v_h = v_ref[:, kvh * D:(kvh + 1) * D]
        acc_sc[h] = alpha * acc_sc[h] + jnp.dot(
            p.astype(v_h.dtype), v_h, preferred_element_type=jnp.float32)
        m_sc[h] = m_new

    # interior (fully visible) kv tiles: skip mask generation entirely
    @pl.when(k_start + (tk - 1) <= q_start)
    def _full_tiles():
        for h in range(n_q_heads):
            online_update(h, scores(h))

    # diagonal-crossing kv tiles: in-kernel causal mask via iota
    @pl.when(jnp.logical_and(k_start <= q_start + (tq - 1),
                             k_start + (tk - 1) > q_start))
    def _diag_tiles():
        row = q_start + jax.lax.broadcasted_iota(jnp.int32, (tq, tk), 0)
        col = k_start + jax.lax.broadcasted_iota(jnp.int32, (tq, tk), 1)
        mask = col <= row
        for h in range(n_q_heads):
            online_update(h, jnp.where(mask, scores(h), _MASK_VALUE))

    @pl.when(ki == pl.num_programs(2) - 1)
    def _finalize():
        for h in range(n_q_heads):
            inv_l = pl.reciprocal(l_sc[h], approx=approx_recip)
            o_ref[:, h * D:(h + 1) * D] = (acc_sc[h] * inv_l).astype(o_ref.dtype)


def _flash_tiles(S, tq_target=_TQ, tk_target=_TKV):
    """Returns (tq, tk, padded_S)."""
    if S <= tq_target:
        return S, S, S
    if S % tq_target == 0 and S % tk_target == 0:
        return tq_target, tk_target, S
    tq = tq_target
    return tq, tq, _round_up(S, tq)


def pallas_flash_attention(q, k, v, n_q_heads, n_kv_heads, head_dim,
                           tq_target=_TQ, tk_target=_TKV):
    """q: [B,S,Hq*D], k/v: [B,S,Hkv*D] -> [B,S,Hq*D] in q.dtype."""
    B, S, _ = q.shape
    D = head_dim
    n_rep = n_q_heads // n_kv_heads
    tq, tk, Sp = _flash_tiles(S, tq_target, tk_target)
    if Sp != S:
        pad = ((0, 0), (0, Sp - S), (0, 0))
        q, k, v = jnp.pad(q, pad), jnp.pad(k, pad), jnp.pad(v, pad)
    grid = (B, Sp // tq, Sp // tk)
    nq, nkv = n_q_heads * D, n_kv_heads * D
    approx_recip = bool(q.dtype != jnp.float32)
    kernel = functools.partial(_flash_attn_kernel, n_q_heads=n_q_heads,
                               n_rep=n_rep, head_dim=D,
                               approx_recip=approx_recip)

    def kv_index_map(b, qi, ki):
        # Clamp to the last kv block that contains any visible key for this q
        # tile: causally-dead kv tiles alias the previous block -> DMA elided.
        last = (qi * tq + (tq - 1)) // tk
        return (b, jnp.minimum(ki, last), 0)

    bytes_acc = ((q.size + k.size + v.size) * q.dtype.itemsize
                 + B * Sp * nq * q.dtype.itemsize)
    out = pl.pallas_call(
        kernel,
        grid=grid,
        in_specs=[
            pl.BlockSpec((None, tq, nq), lambda b, qi, ki: (b, qi, 0)),
            pl.BlockSpec((None, tk, nkv), kv_index_map),
            pl.BlockSpec((None, tk, nkv), kv_index_map),
        ],
        out_specs=pl.BlockSpec((None, tq, nq), lambda b, qi, ki: (b, qi, 0)),
        out_shape=jax.ShapeDtypeStruct((B, Sp, nq), q.dtype),
        scratch_shapes=[
            pltpu.VMEM((n_q_heads, tq, 1), jnp.float32),   # m (running max)
            pltpu.VMEM((n_q_heads, tq, 1), jnp.float32),   # l (running denom)
            pltpu.VMEM((n_q_heads, tq, D), jnp.float32),   # acc
        ],
        compiler_params=pltpu.CompilerParams(
            dimension_semantics=("parallel", "parallel", "arbitrary"),
            vmem_limit_bytes=_VMEM_LIMIT),
        cost_estimate=pl.CostEstimate(
            flops=4 * B * n_q_heads * Sp * Sp * D,
            transcendentals=B * n_q_heads * Sp * Sp,
            bytes_accessed=bytes_acc),
    )(q, k, v)
    if Sp != S:
        out = out[:, :S, :]
    return out


# --------------------------------------------------------------------------- #
# Module
# --------------------------------------------------------------------------- #

class LlamaAttentionPallas:
    def __init__(self, hidden_size, num_heads, num_kv_heads, rope_theta, key,
                 compute_dtype=jnp.bfloat16):
        self.hidden_size = hidden_size
        self.num_heads = num_heads
        self.num_kv_heads = num_kv_heads
        self.head_dim = hidden_size // num_heads
        self.n_rep = num_heads // num_kv_heads
        self.rope_theta = rope_theta
        self.compute_dtype = compute_dtype

        # nn.Linear weights (out_features, in_features), bias=False.
        k0, k1, k2, k3 = jax.random.split(key, 4)
        s = 1.0 / math.sqrt(hidden_size)
        self.wq = jax.random.uniform(k0, (num_heads * self.head_dim, hidden_size),
                                     jnp.float32, -s, s)
        self.wk = jax.random.uniform(k1, (num_kv_heads * self.head_dim, hidden_size),
                                     jnp.float32, -s, s)
        self.wv = jax.random.uniform(k2, (num_kv_heads * self.head_dim, hidden_size),
                                     jnp.float32, -s, s)
        self.wo = jax.random.uniform(k3, (hidden_size, num_heads * self.head_dim),
                                     jnp.float32, -s, s)

        # Fused, pre-transposed ([in, out]) and pre-cast QKV / output weights.
        self.w_qkv_t = jnp.concatenate(
            [self.wq.T, self.wk.T, self.wv.T], axis=1).astype(compute_dtype)
        self.wo_t = self.wo.T.astype(compute_dtype)

    def __call__(self, hidden_states, position_ids, attention_mask=None):
        # TODO(synk): only causal masking (is_causal=True) is generated in-kernel;
        # an arbitrary additive attention_mask (padding) would need an extra
        # tiled mask input stream in the flash kernel.
        assert attention_mask is None, "only causal masking is supported"
        B, S, H = hidden_states.shape
        D = self.head_dim
        Hq, Hkv = self.num_heads, self.num_kv_heads
        cd = self.compute_dtype

        x2d = hidden_states.reshape(B * S, H).astype(cd)

        # fused q/k/v projection: activations streamed from HBM once
        qkv = pallas_matmul(x2d, self.w_qkv_t, out_dtype=cd)
        qkv = qkv.reshape(B, S, (Hq + 2 * Hkv) * D)

        # RoPE + head split + q pre-scale + v pass-through, one kernel,
        # [B, S, H*D] layout throughout (no XLA transposes).
        cos_h, sin_h = rotary_cos_sin_half(position_ids, D, self.rope_theta)
        q_rot, k_rot, v = pallas_rope_split(
            qkv, cos_h, sin_h, Hq, Hkv, D,
            q_scale=1.0 / math.sqrt(D), out_dtype=cd)

        # causal flash attention (online softmax, GQA in-kernel)
        attn = pallas_flash_attention(q_rot, k_rot, v, Hq, Hkv, D)   # [B,S,Hq*D]

        out = pallas_matmul(attn.reshape(B * S, Hq * D), self.wo_t,
                            out_dtype=jnp.float32)
        return out.reshape(B, S, H)


# --------------------------------------------------------------------------- #
# pure-JAX reference (mirrors the PyTorch module, f32 throughout)
# --------------------------------------------------------------------------- #

def reference_forward(mod, hidden_states, position_ids):
    B, S, H = hidden_states.shape
    D = mod.head_dim

    def rotate_half(x):
        d = x.shape[-1]
        return jnp.concatenate((-x[..., d // 2:], x[..., :d // 2]), axis=-1)

    q = (hidden_states @ mod.wq.T).reshape(B, S, mod.num_heads, D).transpose(0, 2, 1, 3)
    k = (hidden_states @ mod.wk.T).reshape(B, S, mod.num_kv_heads, D).transpose(0, 2, 1, 3)
    v = (hidden_states @ mod.wv.T).reshape(B, S, mod.num_kv_heads, D).transpose(0, 2, 1, 3)
    cos_h, sin_h = rotary_cos_sin_half(position_ids, D, mod.rope_theta)
    cos = jnp.concatenate([cos_h, cos_h], axis=-1)[:, None]
    sin = jnp.concatenate([sin_h, sin_h], axis=-1)[:, None]
    q = q * cos + rotate_half(q) * sin
    k = k * cos + rotate_half(k) * sin
    k = jnp.repeat(k, mod.n_rep, axis=1)
    v = jnp.repeat(v, mod.n_rep, axis=1)
    s = jnp.einsum('bhqd,bhkd->bhqk', q, k) / math.sqrt(D)
    neg = jnp.finfo(jnp.float32).min
    i = jnp.arange(S)[:, None]
    j = jnp.arange(S)[None, :]
    s = s + jnp.where(j <= i, 0.0, neg)[None, None]
    p = jax.nn.softmax(s.astype(jnp.float32), axis=-1)
    o = jnp.einsum('bhqk,bhkd->bhqd', p, v)
    o = o.transpose(0, 2, 1, 3).reshape(B, S, mod.num_heads * D)
    return o @ mod.wo.T


# --------------------------------------------------------------------------- #
# main
# --------------------------------------------------------------------------- #

if __name__ == "__main__":
    B, S, HIDDEN = 2, 8, 32
    NUM_HEADS, NUM_KV_HEADS = 4, 2
    ROPE_THETA = 10000.0

    key = jax.random.PRNGKey(0)
    k_param, k_x = jax.random.split(key)

    hidden_states = jax.random.normal(k_x, (B, S, HIDDEN), jnp.float32)
    position_ids = jnp.broadcast_to(jnp.arange(S)[None, :], (B, S))

    # pure-JAX reference (PyTorch semantics, f32)
    mod_f32 = LlamaAttentionPallas(HIDDEN, NUM_HEADS, NUM_KV_HEADS, ROPE_THETA,
                                   k_param, compute_dtype=jnp.float32)
    ref = reference_forward(mod_f32, hidden_states, position_ids)

    # 1) f32 compute path: tight semantic check
    out_f32 = jax.block_until_ready(mod_f32(hidden_states, position_ids))
    assert out_f32.shape == (B, S, HIDDEN)
    assert jnp.allclose(out_f32, ref, rtol=2e-3, atol=2e-3), "f32 mismatch vs reference"

    # 2) bf16 MXU path (production config): loose check, bf16 rounding only
    mod_bf16 = LlamaAttentionPallas(HIDDEN, NUM_HEADS, NUM_KV_HEADS, ROPE_THETA,
                                    k_param, compute_dtype=jnp.bfloat16)
    out_bf16 = jax.block_until_ready(mod_bf16(hidden_states, position_ids))
    assert out_bf16.shape == (B, S, HIDDEN)
    assert jnp.allclose(out_bf16, ref, rtol=1e-1, atol=1e-1), "bf16 mismatch vs reference"

    print("KERNEL_OK")
</pallas_src>

<mosaic_0001>
module attributes {stable_mosaic.version = 11 : i64} {
  func.func @_matmul_kernel(%arg0: i32, %arg1: i32, %arg2: i32, %arg3: memref<16x32xf32, #tpu.memory_space<vmem>>, %arg4: memref<32x64xf32, #tpu.memory_space<vmem>>, %arg5: memref<16x64xf32, #tpu.memory_space<vmem>>, %arg6: memref<16x64xf32, #tpu.memory_space<vmem>>) attributes {dimension_semantics = [#tpu.dimension_semantics<parallel>, #tpu.dimension_semantics<parallel>, #tpu.dimension_semantics<arbitrary>], iteration_bounds = array<i64: 1, 1, 1>, scalar_prefetch = 0 : i64, scratch_operands = 1 : i64, tpu.core_type = #tpu.core_type<tc>, window_params = [{transform_indices = @transform_0, window_bounds = array<i64: 16, 32>}, {transform_indices = @transform_1, window_bounds = array<i64: 32, 64>}, {transform_indices = @transform_2, window_bounds = array<i64: 16, 64>}]} {
    %c0_i32 = arith.constant 0 : i32
    %0 = arith.cmpi eq, %arg2, %c0_i32 : i32
    %1 = arith.extui %0 : i1 to i32
    %c0_i32_0 = arith.constant 0 : i32
    %2 = arith.cmpi ne, %1, %c0_i32_0 : i32
    scf.if %2 {
      %cst_10 = arith.constant 0.000000e+00 : f32
      %12 = vector.broadcast %cst_10 : f32 to vector<16x64xf32>
      %c0_11 = arith.constant 0 : index
      %c0_12 = arith.constant 0 : index
      %13 = vector.load %arg6[%c0_11, %c0_12] : memref<16x64xf32, #tpu.memory_space<vmem>>, vector<16x64xf32>
      tpu.vector_store %arg6[%c0_11, %c0_12], %12 {strides = array<i32>} : memref<16x64xf32, #tpu.memory_space<vmem>>, vector<16x64xf32>,
    } else {
    }
    %c0 = arith.constant 0 : index
    %c0_1 = arith.constant 0 : index
    %3 = vector.load %arg6[%c0, %c0_1] : memref<16x64xf32, #tpu.memory_space<vmem>>, vector<16x64xf32>
    %c0_2 = arith.constant 0 : index
    %c0_3 = arith.constant 0 : index
    %4 = vector.load %arg3[%c0_2, %c0_3] : memref<16x32xf32, #tpu.memory_space<vmem>>, vector<16x32xf32>
    %c0_4 = arith.constant 0 : index
    %c0_5 = arith.constant 0 : index
    %5 = vector.load %arg4[%c0_4, %c0_5] : memref<32x64xf32, #tpu.memory_space<vmem>>, vector<32x64xf32>
    %cst = arith.constant dense<0.000000e+00> : vector<16x64xf32>
    %6 = tpu.matmul %4, %5, %cst {dimension_numbers = #tpu.dot_dimension_numbers<[1], [0], [0], [1], [0, 0, 1, 1], [], []>} : vector<16x32xf32>, vector<32x64xf32>, vector<16x64xf32> -> vector<16x64xf32>
    %7 = arith.addf %3, %6 : vector<16x64xf32>
    %c0_6 = arith.constant 0 : index
    %c0_7 = arith.constant 0 : index
    %8 = vector.load %arg6[%c0_6, %c0_7] : memref<16x64xf32, #tpu.memory_space<vmem>>, vector<16x64xf32>
    tpu.vector_store %arg6[%c0_6, %c0_7], %7 {strides = array<i32>} : memref<16x64xf32, #tpu.memory_space<vmem>>, vector<16x64xf32>,
    %c0_i32_8 = arith.constant 0 : i32
    %9 = arith.cmpi eq, %arg2, %c0_i32_8 : i32
    %10 = arith.extui %9 : i1 to i32
    %c0_i32_9 = arith.constant 0 : i32
    %11 = arith.cmpi ne, %10, %c0_i32_9 : i32
    scf.if %11 {
      %c0_10 = arith.constant 0 : index
      %c0_11 = arith.constant 0 : index
      %12 = vector.load %arg6[%c0_10, %c0_11] : memref<16x64xf32, #tpu.memory_space<vmem>>, vector<16x64xf32>
      %c0_12 = arith.constant 0 : index
      %c0_13 = arith.constant 0 : index
      %13 = vector.load %arg5[%c0_12, %c0_13] : memref<16x64xf32, #tpu.memory_space<vmem>>, vector<16x64xf32>
      tpu.vector_store %arg5[%c0_12, %c0_13], %12 {strides = array<i32>} : memref<16x64xf32, #tpu.memory_space<vmem>>, vector<16x64xf32>,
    } else {
    }
    return
  }
  func.func @transform_0(%arg0: i32, %arg1: i32, %arg2: i32) -> (i32, i32) {
    %c0_i32 = arith.constant 0 : i32
    return %arg0, %arg2 : i32, i32
  }
  func.func @transform_1(%arg0: i32, %arg1: i32, %arg2: i32) -> (i32, i32) {
    %c0_i32 = arith.constant 0 : i32
    return %arg2, %arg1 : i32, i32
  }
  func.func @transform_2(%arg0: i32, %arg1: i32, %arg2: i32) -> (i32, i32) {
    %c0_i32 = arith.constant 0 : i32
    return %arg0, %arg1 : i32, i32
  }
}

</mosaic_0001>

<llo_original>
// kernel: tpu_custom_call.1
$region0: #{tpu_custom_call.1}
  #allocation0 [shape = 'u32[]', space=smem, size = 0x4, offset = 0x4, fixed_abs, tag = 'smem constant byte address 0x4 - core index']
  #allocation1 [shape = 'u32[144,128]{1,0:T(1,128)}', space=vmem, size = 0x12000, scoped, tag = 'internal scratch']
  #allocation2 [shape = 'f32[16,64]{1,0:T(8,128)}', space=vmem, size = 0x2000, scoped, tag = 'scratch operand']
  %s0 = inlined_call_operand.hbm [shape: f32[16,32], index: 0, kind: input, shape index: {}]
  %s1 = inlined_call_operand.hbm [shape: f32[32,64], index: 1, kind: input, shape index: {}]
  %s2 = inlined_call_operand.hbm [shape: f32[16,64], index: 2, kind: output, shape index: {}]
  %s3 = sld [smem:[#allocation0]]
  $region34: #{tpu_custom_call.1} parent=0
    _
  %s5 = ssub.s32 1, %s3
  %s6 = scalar_select 0, %s5, %s3
  $region1: #{tpu_custom_call.1} parent=0
    #allocation3 [shape = 'u8[8192]{0}', space=vmem, size = 0x2000, scoped, tag = 'input window, operand 0, single buffered']
    #allocation4 [shape = 's32[1]{0}', space=sflag, size = 0x4, scoped, tag = 'scoped memory for tpu_custom_call.1']
    #allocation5 [shape = 's32[1]{0}', space=sflag, size = 0x4, scoped, tag = 'scoped memory for tpu_custom_call.1']
    #allocation6 [shape = 'u8[16384]{0}', space=vmem, size = 0x4000, scoped, tag = 'input window, operand 1, single buffered']
    #allocation7 [shape = 's32[1]{0}', space=sflag, size = 0x4, scoped, tag = 'scoped memory for tpu_custom_call.1']
    #allocation8 [shape = 'u8[8192]{0}', space=vmem, size = 0x2000, scoped, tag = 'output window, operand 0, single buffered']
    %7 = vsyncpa [#allocation4], 0
    %8 = vsyncpa [#allocation7], 0
    %9 = vsyncpa [#allocation5], 0
    // Predicated region
    $region2: #{tpu_custom_call.1} parent=1 // pred_check
      _
    $region3: #{tpu_custom_call.1} parent=1 // pred_check_branch
      %11 = sbr.rel (0) target = $region5
    $region4: #{tpu_custom_call.1} parent=1 // pred_region
      %s13 = ssub.s32 256, 256
      %14 = vsyncadd [#allocation4], %s13
      %s15 = sshll.u32 [#allocation3], 4
      %s16 = int_to_ptr.vmem [resolvable:$true] %s15
      %21 = dma.hbm_to_vmem [thread:$0]  %s0, 256, %s16, [#allocation4], 128, 128, 8
    $region5: #{tpu_custom_call.1} parent=1 // pred_fallthru
      _
    // Predicated region
    $region6: #{tpu_custom_call.1} parent=1 // pred_check
      _
    $region7: #{tpu_custom_call.1} parent=1 // pred_check_branch
      %23 = sbr.rel (0) target = $region9
    $region8: #{tpu_custom_call.1} parent=1 // pred_region
      %s25 = ssub.s32 512, 512
      %26 = vsyncadd [#allocation7], %s25
      %s27 = sshll.u32 [#allocation6], 4
      %s28 = int_to_ptr.vmem [resolvable:$true] %s27
      %33 = dma.hbm_to_vmem [thread:$0]  %s1, 512, %s28, [#allocation7], 128, 128, 8
    $region9: #{tpu_custom_call.1} parent=1 // pred_fallthru
      _
    // Predicated region
    $region10: #{tpu_custom_call.1} parent=1 // pred_check
      _
    $region11: #{tpu_custom_call.1} parent=1 // pred_check_branch
      %35 = sbr.rel (0) target = $region13
    $region12: #{tpu_custom_call.1} parent=1 // pred_region
      %36 = dma.done [#allocation4], 256
    $region13: #{tpu_custom_call.1} parent=1 // pred_fallthru
      _
    // Predicated region
    $region14: #{tpu_custom_call.1} parent=1 // pred_check
      _
    $region15: #{tpu_custom_call.1} parent=1 // pred_check_branch
      %38 = sbr.rel (0) target = $region17
    $region16: #{tpu_custom_call.1} parent=1 // pred_region
      %39 = dma.done [#allocation7], 512
    $region17: #{tpu_custom_call.1} parent=1 // pred_fallthru
      _
    %p40 = scmp.eq.s32.totalorder 0, 0
    // Predicated region
    $region18: #{tpu_custom_call.1} parent=1 // pred_check
      %p41 = pneg %p40
    $region19: #{tpu_custom_call.1} parent=1 // pred_check_branch
      %43 = sbr.rel (%p41) target = $region21
    $region20: #{tpu_custom_call.1} parent=1 // pred_region
      %vm44 = vcmask 523264
      %45 = vst.msk [vmem:[#allocation2] sm:$0xff] %vm44, 0.0
      %46 = vst.msk [vmem:[#allocation2 + $0x8] sm:$0xff] %vm44, 0.0
    $region21: #{tpu_custom_call.1} parent=1 // pred_fallthru
      _
    %v47 = vld [vmem:[#allocation2] sm:$0xff]
    %v48 = vld [vmem:[#allocation2 + $0x8] sm:$0xff]
    %v49 = vld [vmem:[#allocation3] sm:$0xff]
    %v50 = vld [vmem:[#allocation3 + $0x8] sm:$0xff]
    %v51 = vld [vmem:[#allocation6] sm:$0xff]
    %v52 = vld [vmem:[#allocation6 + $0x8] sm:$0xff]
    %v53 = vld [vmem:[#allocation6 + $0x10] sm:$0xff]
    %v54 = vld [vmem:[#allocation6 + $0x18] sm:$0xff]
    %vm55 = vcmask 261120
    %v57 = vsel %vm55, %v49, 0
    %v60 = vsel %vm55, %v50, 0
    %62 = vmatprep.subr.mxu0 0.0
    %63 = vmatpush1.msra.mxu0 %v51
    %64 = vmatprep.subr.mxu0 0.0
    %65 = vmatpush1.msra.mxu0 %v52
    %66 = vmatprep.subr.mxu0 0.0
    %67 = vmatpush1.msra.mxu0 %v53
    %68 = vmatprep.subr.mxu0 0.0
    %69 = vmatpush1.msra.mxu0 %v54
    %70 = vmatprep.subr.mxu0 0.0
    %71 = vmatpush1.msra.mxu0 0.0
    %72 = vmatprep.subr.mxu0 0.0
    %73 = vmatpush1.msra.mxu0 0.0
    %74 = vmatprep.subr.mxu0 0.0
    %75 = vmatpush1.msra.mxu0 0.0
    %76 = vmatprep.subr.mxu0 0.0
    %77 = vmatpush1.msra.mxu0 0.0
    %78 = vmatprep.subr.mxu0 0.0
    %79 = vmatpush1.msra.mxu0 0.0
    %80 = vmatprep.subr.mxu0 0.0
    %81 = vmatpush1.msra.mxu0 0.0
    %82 = vmatprep.subr.mxu0 0.0
    %83 = vmatpush1.msra.mxu0 0.0
    %84 = vmatprep.subr.mxu0 0.0
    %85 = vmatpush1.msra.mxu0 0.0
    %86 = vmatprep.subr.mxu0 0.0
    %87 = vmatpush1.msra.mxu0 0.0
    %88 = vmatprep.subr.mxu0 0.0
    %89 = vmatpush1.msra.mxu0 0.0
    %90 = vmatprep.subr.mxu0 0.0
    %91 = vmatpush1.msra.mxu0 0.0
    %92 = vmatprep.subr.mxu0 0.0
    %93 = vmatpush1.msra.mxu0 0.0
    %94 = vmatprep.subr.mxu0 0.0
    %95 = vmatpush1.msra.mxu0 0.0
    %96 = vmatprep.subr.mxu0 0.0
    %97 = vmatpush1.msra.mxu0 0.0
    %98 = vmatprep.subr.mxu0 0.0
    %99 = vmatpush1.msra.mxu0 0.0
    %100 = vmatprep.subr.mxu0 0.0
    %101 = vmatpush1.msra.mxu0 0.0
    %102 = vmatprep.subr.mxu0 0.0
    %103 = vmatpush1.msra.mxu0 0.0
    %104 = vmatprep.subr.mxu0 0.0
    %105 = vmatpush1.msra.mxu0 0.0
    %106 = vmatprep.subr.mxu0 0.0
    %107 = vmatpush1.msra.mxu0 0.0
    %108 = vmatprep.subr.mxu0 0.0
    %109 = vmatpush1.msra.mxu0 0.0
    %110 = vmatprep.subr.mxu0 0.0
    %111 = vmatpush1.msra.mxu0 0.0
    %112 = vmatprep.subr.mxu0 0.0
    %113 = vmatpush1.msra.mxu0 0.0
    %114 = vmatprep.subr.mxu0 0.0
    %115 = vmatpush1.msra.mxu0 0.0
    %116 = vmatprep.subr.mxu0 0.0
    %117 = vmatpush1.msra.mxu0 0.0
    %118 = vmatprep.subr.mxu0 0.0
    %119 = vmatpush1.msra.mxu0 0.0
    %120 = vmatprep.subr.mxu0 0.0
    %121 = vmatpush1.msra.mxu0 0.0
    %122 = vmatprep.subr.mxu0 0.0
    %123 = vmatpush1.msra.mxu0 0.0
    %124 = vmatprep.subr.mxu0 0.0
    %125 = vmatpush1.msra.mxu0 0.0
    %126 = vmatprep.mubr.f32.mxu0 0.0
    %127 = vmatmul.mubr.f32.gmra.mrb[0].mxu0 %v57
    %v128 = vpop.f32.mrb[0].mxu0
    %v129 = vadd.f32 0.0, %v128
    %v130 = vpop.f32.mrb[0].mxu0
    %131 = vmatprep.mubr.f32.mxu0 0.0
    %132 = vmatmul.mubr.f32.gmra.mrb[0].mxu0 %v60
    %v133 = vpop.f32.mrb[0].mxu0
    %v134 = vadd.f32 0.0, %v133
    %v135 = vpop.f32.mrb[0].mxu0
    %136 = vdwg.mxu0
    %v137 = vadd.f32 %v47, %v129
    %v138 = vadd.f32 %v48, %v134
    %vm139 = vcmask 523264
    %140 = vst.msk [vmem:[#allocation2] sm:$0xff] %vm139, %v137
    %141 = vst.msk [vmem:[#allocation2 + $0x8] sm:$0xff] %vm139, %v138
    // Predicated region
    $region22: #{tpu_custom_call.1} parent=1 // pred_check
      %p142 = pneg %p40
    $region23: #{tpu_custom_call.1} parent=1 // pred_check_branch
      %144 = sbr.rel (%p142) target = $region25
    $region24: #{tpu_custom_call.1} parent=1 // pred_region
      %v145 = vld [vmem:[#allocation2] sm:$0xff]
      %v146 = vld [vmem:[#allocation2 + $0x8] sm:$0xff]
      %147 = vst.msk [vmem:[#allocation8] sm:$0xff] %vm139, %v145
      %148 = vst.msk [vmem:[#allocation8 + $0x8] sm:$0xff] %vm139, %v146
    $region25: #{tpu_custom_call.1} parent=1 // pred_fallthru
      _
    // Predicated region
    $region26: #{tpu_custom_call.1} parent=1 // pred_check
      _
    $region27: #{tpu_custom_call.1} parent=1 // pred_check_branch
      %150 = sbr.rel (0) target = $region29
    $region28: #{tpu_custom_call.1} parent=1 // pred_region
      %s152 = ssub.s32 256, 256
      %153 = vsyncadd [#allocation5], %s152
      %s154 = sshll.u32 [#allocation8], 4
      %s155 = int_to_ptr.vmem [resolvable:$true] %s154
      %160 = dma.vmem_to_hbm [thread:$0]  %s155, 256, %s2, [#allocation5], 128, 128, 8
    $region29: #{tpu_custom_call.1} parent=1 // pred_fallthru
      _
    // Predicated region
    $region30: #{tpu_custom_call.1} parent=1 // pred_check
      _
    $region31: #{tpu_custom_call.1} parent=1 // pred_check_branch
      %162 = sbr.rel (0) target = $region33
    $region32: #{tpu_custom_call.1} parent=1 // pred_region
      %163 = dma.done [#allocation5], 256
    $region33: #{tpu_custom_call.1} parent=1 // pred_fallthru
      _
    %164 = vsyncpa [#allocation4], 1
    %165 = vsyncpa [#allocation7], 1
    %166 = vsyncpa [#allocation5], 1

</llo_original>
